<compile_context>
chip_gen: v5e
topology: v5e:2x2
jax: 0.10.0
libtpu: 0.0.40
codegen_flags: <defaults>
</compile_context>

<pallas_src>
import jax
import jax.numpy as jnp
from jax.experimental import pallas as pl
from jax.experimental.pallas import tpu as pltpu


# ----------------------------------------------------------------------------
# helpers
# ----------------------------------------------------------------------------

def _round_up(x, m):
    return ((x + m - 1) // m) * m


# ----------------------------------------------------------------------------
# Pallas kernels
# ----------------------------------------------------------------------------

def _embed_kernel(x_ref, w_ref, b_ref, o_ref):
    # o = relu(x @ W + b), W pre-transposed to [in, out]
    y = jnp.dot(x_ref[...], w_ref[...], preferred_element_type=jnp.float32)
    o_ref[...] = jnp.maximum(y + b_ref[...], 0.0)


def _sage_fused_kernel(h0_hbm, a_ref, w_ref, b_ref, o_ref,
                       h_cur, h_nxt, acc_ref):
    # Grid = (layer l, row-tile i, k-tile k); k is the A@h reduction axis.
    l = pl.program_id(0)
    i = pl.program_id(1)
    k = pl.program_id(2)
    ni = pl.num_programs(1)
    nk = pl.num_programs(2)
    tm, tk = a_ref.shape  # static block shape

    # One-time prologue: DMA the embedding output (all rows) into h_cur.
    @pl.when((l == 0) & (i == 0) & (k == 0))
    def _():
        pltpu.sync_copy(h0_hbm, h_cur)

    # Init the aggregation accumulator for this (l, i).
    @pl.when(k == 0)
    def _():
        acc_ref[...] = jnp.zeros_like(acc_ref)

    # Partial mean-aggregation: acc += A[i, k] @ h_cur[k-strip]
    k0 = pl.multiple_of(k * tk, tk)
    acc_ref[...] += jnp.dot(a_ref[...], h_cur[pl.ds(k0, tk), :],
                            preferred_element_type=jnp.float32)

    # Finalize this row tile: one fused K=2H matmul, bias, ReLU, store.
    @pl.when(k == nk - 1)
    def _():
        i0 = pl.multiple_of(i * tm, tm)
        h_self = h_cur[pl.ds(i0, tm), :]
        z = jnp.concatenate([acc_ref[...], h_self], axis=1)      # (tm, 2H)
        y = jnp.dot(z, w_ref[0], preferred_element_type=jnp.float32) + b_ref[0]
        h_new = jnp.maximum(y, 0.0)
        h_nxt[pl.ds(i0, tm), :] = h_new
        o_ref[...] = h_new

    # Layer finished: promote h_nxt -> h_cur for the next layer (VMEM copy).
    @pl.when((k == nk - 1) & (i == ni - 1))
    def _():
        h_cur[...] = h_nxt[...]


# ----------------------------------------------------------------------------
# pallas_call wrappers
# ----------------------------------------------------------------------------

def _embed(x, w, b, *, tm):
    n_pad, d_pad = x.shape
    h_pad = w.shape[1]
    grid = (n_pad // tm,)
    return pl.pallas_call(
        _embed_kernel,
        out_shape=jax.ShapeDtypeStruct((n_pad, h_pad), jnp.float32),
        grid_spec=pltpu.PrefetchScalarGridSpec(
            num_scalar_prefetch=0,
            grid=grid,
            in_specs=[
                pl.BlockSpec((tm, d_pad), lambda i: (i, 0)),
                pl.BlockSpec((d_pad, h_pad), lambda i: (0, 0)),
                pl.BlockSpec((1, h_pad), lambda i: (0, 0)),
            ],
            out_specs=pl.BlockSpec((tm, h_pad), lambda i: (i, 0)),
        ),
        compiler_params=pltpu.CompilerParams(
            dimension_semantics=("parallel",)),
    )(x, w, b)


def _sage_fused(a, h0, w_cat, b_cat, *, tm, tk):
    n_pad = a.shape[0]
    h_pad = h0.shape[1]
    num_layers = w_cat.shape[0]
    gi = n_pad // tm
    gk = n_pad // tk
    grid = (num_layers, gi, gk)

    # Advisory cost estimate (aggregation + fused linear, per layer).
    flops = (2 * num_layers * n_pad * n_pad * h_pad
             + 2 * num_layers * n_pad * (2 * h_pad) * h_pad)
    bytes_accessed = (num_layers * n_pad * n_pad * 4      # A streamed per layer
                      + n_pad * h_pad * 4                 # h0 read
                      + num_layers * n_pad * h_pad * 4    # per-layer out flushes
                      + num_layers * (2 * h_pad * h_pad + h_pad) * 4)

    # Scoped-VMEM budget: scratch + double-buffered block windows + headroom.
    scratch_bytes = (2 * n_pad * h_pad + tm * h_pad) * 4
    block_bytes = 2 * (tm * tk + 2 * h_pad * h_pad + h_pad + tm * h_pad) * 4
    vmem_limit = int(max(scratch_bytes + block_bytes + (4 << 20), 16 << 20))

    return pl.pallas_call(
        _sage_fused_kernel,
        out_shape=jax.ShapeDtypeStruct((n_pad, h_pad), jnp.float32),
        grid_spec=pltpu.PrefetchScalarGridSpec(
            num_scalar_prefetch=0,
            grid=grid,
            in_specs=[
                pl.BlockSpec(memory_space=pl.ANY),                         # h0 (HBM)
                pl.BlockSpec((tm, tk), lambda l, i, k: (i, k)),            # A tile
                pl.BlockSpec((1, 2 * h_pad, h_pad),
                             lambda l, i, k: (l, 0, 0)),                   # [Wl;Wr].T
                pl.BlockSpec((1, 1, h_pad), lambda l, i, k: (l, 0, 0)),    # bias_l
            ],
            out_specs=pl.BlockSpec((tm, h_pad), lambda l, i, k: (i, 0)),
            scratch_shapes=[
                pltpu.VMEM((n_pad, h_pad), jnp.float32),   # h_cur (layer input)
                pltpu.VMEM((n_pad, h_pad), jnp.float32),   # h_nxt (layer output)
                pltpu.VMEM((tm, h_pad), jnp.float32),      # aggregation accumulator
            ],
        ),
        compiler_params=pltpu.CompilerParams(
            dimension_semantics=("arbitrary", "arbitrary", "arbitrary"),
            vmem_limit_bytes=vmem_limit),
        cost_estimate=pl.CostEstimate(flops=flops, transcendentals=0,
                                      bytes_accessed=bytes_accessed),
    )(h0, a, w_cat, b_cat)


# ----------------------------------------------------------------------------
# Model wrapper (glue in plain JAX)
# ----------------------------------------------------------------------------

def init_params(key, input_dim, hidden_dim, output_dim, num_layers):
    """Deterministic synthetic parameter init (PyTorch Linear shapes)."""
    ks = jax.random.split(key, 2 + 2 * num_layers)
    params = {}
    s_in = 1.0 / jnp.sqrt(input_dim)
    params["emb_w"] = jax.random.uniform(ks[0], (hidden_dim, input_dim),
                                         jnp.float32, -s_in, s_in)
    params["emb_b"] = jax.random.uniform(ks[1], (1, hidden_dim),
                                         jnp.float32, -s_in, s_in)
    s_h = 1.0 / jnp.sqrt(hidden_dim)
    params["convs"] = []
    for l in range(num_layers):
        k_l, k_r = ks[2 + 2 * l], ks[3 + 2 * l]
        wl = jax.random.uniform(k_l, (hidden_dim, hidden_dim),
                                jnp.float32, -s_h, s_h)
        bl = jax.random.uniform(jax.random.fold_in(k_l, 1), (1, hidden_dim),
                                jnp.float32, -s_h, s_h)
        wr = jax.random.uniform(k_r, (hidden_dim, hidden_dim),
                                jnp.float32, -s_h, s_h)  # lin_r has no bias in PyG
        params["convs"].append((wl, bl, wr))
    # scorer / output heads are not used in forward(); omitted from hot path.
    return params


def pack_params(params, input_dim, hidden_dim):
    """Pad to lane-dense shapes, pre-transpose weights, stack layer weights."""
    d_pad = _round_up(input_dim, 128)
    h_pad = _round_up(hidden_dim, 128)
    num_layers = len(params["convs"])

    emb_w = jnp.zeros((d_pad, h_pad), jnp.float32)
    emb_w = emb_w.at[:input_dim, :hidden_dim].set(params["emb_w"].T)
    emb_b = jnp.zeros((1, h_pad), jnp.float32)
    emb_b = emb_b.at[:, :hidden_dim].set(params["emb_b"])

    w_cat = jnp.zeros((num_layers, 2 * h_pad, h_pad), jnp.float32)
    b_cat = jnp.zeros((num_layers, 1, h_pad), jnp.float32)
    for l, (wl, bl, wr) in enumerate(params["convs"]):
        w_cat = w_cat.at[l, :hidden_dim, :hidden_dim].set(wl.T)                  # agg path
        w_cat = w_cat.at[l, h_pad:h_pad + hidden_dim, :hidden_dim].set(wr.T)     # self path
        b_cat = b_cat.at[l, 0, :hidden_dim].set(bl[0])

    return {"emb_w": emb_w, "emb_b": emb_b, "w_cat": w_cat, "b_cat": b_cat,
            "d_pad": d_pad, "h_pad": h_pad}


def build_mean_adjacency(edge_index, num_nodes, num_nodes_padded=None):
    """Dense row-normalized adjacency: A[i, j] = 1/deg_in(i) per edge j->i."""
    n = num_nodes if num_nodes_padded is None else num_nodes_padded
    src, dst = edge_index[0], edge_index[1]
    a = jnp.zeros((n, n), jnp.float32)
    a = a.at[dst, src].add(1.0)
    deg = a.sum(axis=1, keepdims=True)
    return a / jnp.maximum(deg, 1.0)


def wiki_graphsage_forward(params, x, edge_index, *, tile=128):
    """Inference-mode forward; dropout is identity (training=False)."""
    n, d_in = x.shape
    hidden = params["emb_w"].shape[0]
    packed = pack_params(params, d_in, hidden)
    d_pad, h_pad = packed["d_pad"], packed["h_pad"]
    n_pad = _round_up(n, tile)

    x_pad = jnp.zeros((n_pad, d_pad), jnp.float32).at[:n, :d_in].set(x)
    a_pad = build_mean_adjacency(edge_index, n, n_pad)   # padded rows/cols are 0

    h0 = _embed(x_pad, packed["emb_w"], packed["emb_b"], tm=tile)
    h = _sage_fused(a_pad, h0, packed["w_cat"], packed["b_cat"],
                    tm=tile, tk=tile)
    return h[:n, :hidden]


# ----------------------------------------------------------------------------
# Pure-JAX reference for validation
# ----------------------------------------------------------------------------

def reference_forward(params, x, edge_index):
    n = x.shape[0]
    a = build_mean_adjacency(edge_index, n)
    h = jax.nn.relu(x @ params["emb_w"].T + params["emb_b"])
    for (wl, bl, wr) in params["convs"]:
        agg = a @ h
        h = jax.nn.relu(agg @ wl.T + bl + h @ wr.T)
    return h


# ----------------------------------------------------------------------------

if __name__ == "__main__":
    INPUT_DIM, HIDDEN_DIM, OUTPUT_DIM, NUM_LAYERS = 64, 32, 8, 4
    N_NODES, N_EDGES = 200, 600   # pads to 256 -> grid (4 layers, 2 row tiles, 2 k tiles)

    key = jax.random.PRNGKey(0)
    k_param, k_x, k_src, k_dst = jax.random.split(key, 4)

    params = init_params(k_param, INPUT_DIM, HIDDEN_DIM, OUTPUT_DIM, NUM_LAYERS)

    x = jax.random.normal(k_x, (N_NODES, INPUT_DIM), jnp.float32)
    src = jax.random.randint(k_src, (N_EDGES,), 0, N_NODES)
    dst = jax.random.randint(k_dst, (N_EDGES,), 0, N_NODES)
    edge_index = jnp.stack([src, dst], axis=0)  # [2, E]

    h = wiki_graphsage_forward(params, x, edge_index)
    h = jax.block_until_ready(h)

    h_ref = reference_forward(params, x, edge_index)
    assert h.shape == (N_NODES, HIDDEN_DIM)
    assert jnp.allclose(h, h_ref, atol=1e-3, rtol=1e-3), "mismatch vs reference"

    print("KERNEL_OK")
</pallas_src>

<mosaic_0001>
module attributes {stable_mosaic.version = 11 : i64} {
  func.func @_embed_kernel(%arg0: i32, %arg1: memref<128x128xf32, #tpu.memory_space<vmem>>, %arg2: memref<128x128xf32, #tpu.memory_space<vmem>>, %arg3: memref<1x128xf32, #tpu.memory_space<vmem>>, %arg4: memref<128x128xf32, #tpu.memory_space<vmem>>) attributes {dimension_semantics = [#tpu.dimension_semantics<parallel>], iteration_bounds = array<i64: 2>, scalar_prefetch = 0 : i64, scratch_operands = 0 : i64, tpu.core_type = #tpu.core_type<tc>, window_params = [{transform_indices = @transform_0, window_bounds = array<i64: 128, 128>}, {pipeline_mode = #tpu.pipeline_mode<synchronous>, transform_indices = @transform_1, window_bounds = array<i64: 128, 128>}, {pipeline_mode = #tpu.pipeline_mode<synchronous>, transform_indices = @transform_2, window_bounds = array<i64: 1, 128>}, {transform_indices = @transform_3, window_bounds = array<i64: 128, 128>}]} {
    %c0 = arith.constant 0 : index
    %c0_0 = arith.constant 0 : index
    %0 = vector.load %arg1[%c0, %c0_0] : memref<128x128xf32, #tpu.memory_space<vmem>>, vector<128x128xf32>
    %c0_1 = arith.constant 0 : index
    %c0_2 = arith.constant 0 : index
    %1 = vector.load %arg2[%c0_1, %c0_2] : memref<128x128xf32, #tpu.memory_space<vmem>>, vector<128x128xf32>
    %cst = arith.constant dense<0.000000e+00> : vector<128x128xf32>
    %2 = tpu.matmul %0, %1, %cst {dimension_numbers = #tpu.dot_dimension_numbers<[1], [0], [0], [1], [0, 0, 1, 1], [], []>} : vector<128x128xf32>, vector<128x128xf32>, vector<128x128xf32> -> vector<128x128xf32>
    %c0_3 = arith.constant 0 : index
    %c0_4 = arith.constant 0 : index
    %3 = vector.load %arg3[%c0_3, %c0_4] : memref<1x128xf32, #tpu.memory_space<vmem>>, vector<1x128xf32>
    %4 = vector.broadcast %3 : vector<1x128xf32> to vector<128x128xf32>
    %5 = arith.addf %2, %4 : vector<128x128xf32>
    %cst_5 = arith.constant 0.000000e+00 : f32
    %6 = vector.broadcast %cst_5 : f32 to vector<128x128xf32>
    %7 = arith.maximumf %5, %6 : vector<128x128xf32>
    %c0_6 = arith.constant 0 : index
    %c0_7 = arith.constant 0 : index
    %8 = vector.load %arg4[%c0_6, %c0_7] : memref<128x128xf32, #tpu.memory_space<vmem>>, vector<128x128xf32>
    tpu.vector_store %arg4[%c0_6, %c0_7], %7 {strides = array<i32>} : memref<128x128xf32, #tpu.memory_space<vmem>>, vector<128x128xf32>,
    return
  }
  func.func @transform_0(%arg0: i32) -> (i32, i32) {
    %c0_i32 = arith.constant 0 : i32
    %c0_i32_0 = arith.constant 0 : i32
    return %arg0, %c0_i32 : i32, i32
  }
  func.func @transform_1(%arg0: i32) -> (i32, i32) {
    %c0_i32 = arith.constant 0 : i32
    %c0_i32_0 = arith.constant 0 : i32
    %c0_i32_1 = arith.constant 0 : i32
    return %c0_i32, %c0_i32_0 : i32, i32
  }
  func.func @transform_2(%arg0: i32) -> (i32, i32) {
    %c0_i32 = arith.constant 0 : i32
    %c0_i32_0 = arith.constant 0 : i32
    %c0_i32_1 = arith.constant 0 : i32
    return %c0_i32, %c0_i32_0 : i32, i32
  }
  func.func @transform_3(%arg0: i32) -> (i32, i32) {
    %c0_i32 = arith.constant 0 : i32
    %c0_i32_0 = arith.constant 0 : i32
    return %arg0, %c0_i32 : i32, i32
  }
}

</mosaic_0001>

<llo_original>
// kernel: tpu_custom_call.1
$region0: #{tpu_custom_call.1}
  #allocation0 [shape = 'u32[]', space=smem, size = 0x4, offset = 0x4, fixed_abs, tag = 'smem constant byte address 0x4 - core index']
  #allocation1 [shape = 'u32[72,128]{1,0:T(1,128)}', space=vmem, size = 0x9000, scoped, tag = 'internal scratch']
  %s0 = inlined_call_operand.hbm [shape: f32[256,128], index: 0, kind: input, shape index: {}]
  %s1 = inlined_call_operand.hbm [shape: f32[128,128], index: 1, kind: input, shape index: {}]
  %s2 = inlined_call_operand.vmem [shape: f32[1,128], index: 2, kind: input, shape index: {}]
  %s3 = inlined_call_operand.hbm [shape: f32[256,128], index: 3, kind: output, shape index: {}]
  %s4 = sld [smem:[#allocation0]]
  $region53: #{tpu_custom_call.1} parent=0
    _
  %s6 = ssub.s32 1, %s4
  %s7 = scalar_select 0, %s6, %s4
  $region1: #{tpu_custom_call.1} parent=0
    #allocation2 [shape = 'u8[131072]{0}', space=vmem, size = 0x20000, scoped, tag = 'input window, operand 0']
    #allocation3 [shape = 's32[2]{0}', space=sflag, size = 0x8, scoped, tag = 'scoped memory for tpu_custom_call.1']
    #allocation4 [shape = 's32[2]{0}', space=sflag, size = 0x8, scoped, tag = 'scoped memory for tpu_custom_call.1']
    #allocation5 [shape = 'u8[65536]{0}', space=vmem, size = 0x10000, scoped, tag = 'input window, operand 1, single buffered']
    #allocation6 [shape = 's32[1]{0}', space=sflag, size = 0x4, scoped, tag = 'scoped memory for tpu_custom_call.1']
    #allocation7 [shape = 'u8[131072]{0}', space=vmem, size = 0x20000, scoped, tag = 'output window, operand 0']
    %8 = vsyncpa [#allocation3], 0
    %s9 = scalar_lea.sflag [#allocation3], 1
    %10 = vsyncpa %s9, 0
    %11 = vsyncpa [#allocation6], 0
    %12 = vsyncpa [#allocation4], 0
    %s13 = scalar_lea.sflag [#allocation4], 1
    %14 = vsyncpa %s13, 0
    loop: start=0, step=1, limit=4
    $region2: #{tpu_custom_call.1} parent=1 // loop_pre_header
      _
    $region3: #{tpu_custom_call.1} parent=1 // loop_header
      %s16 = sphi 0, %s20
      %p17 = scmp.ge.s32.totalorder %s16, 4
      %s26 = sphi 0, %s28
      %s29 = sphi 0, %s26
      %s30 = sphi 0, %s29
      %s46 = sphi 0, %s30
      %s50 = sphi 0, %s50
      %s52 = sphi 0, %s50
      %s53 = sphi 0, %s52
      %s67 = sphi 0, %s53
      %s71 = sphi 0, %s71
      %s73 = sphi 0, %s71
      %s74 = sphi 0, %s73
      %s88 = sphi 0, %s74
      %s94 = sphi 0, %s96
      %s97 = sphi 0, %s94
      %s98 = sphi 0, %s97
      %s114 = sphi 0, %s98
    $region4: #{tpu_custom_call.1} parent=1 // loop_header_branch
      %19 = sbr.rel (%p17) target = $region8
    $region5: #{tpu_custom_call.1} parent=1 // loop_body
      %s21 = ssub.s32 %s16, 1
      %s22 = ssub.s32 %s16, 2
      %s23 = sadd.s32 %s16, 1
      %s24 = ssub.s32 %s16, %s23
      %p25 = scmp.eq.s32.totalorder %s24, 0
      %s27 = sadd.s32 %s26, 1
      %s28 = scalar_select %p25, %s26, %s27
      %p31 = pneg %p25
      %p32 = scmp.eq.s32.totalorder %s16, 1
      %p33 = por %p31, %p32
      %p34 = scmp.ne.s32.totalorder %s26, %s29
      %p35 = scmp.eq.s32.totalorder %s16, 0
      %p36 = por %p34, %p35
      %p37 = scmp.ne.s32.totalorder %s26, %s29
      %p38 = scmp.eq.s32.totalorder %s21, 1
      %p39 = por %p37, %p38
      %p40 = scmp.ne.s32.totalorder %s29, %s30
      %p41 = scmp.eq.s32.totalorder %s21, 0
      %p42 = por %p40, %p41
      %p43 = scmp.ne.s32.totalorder %s29, %s30
      %p44 = scmp.eq.s32.totalorder %s22, 1
      %p45 = por %p43, %p44
      %p47 = scmp.ne.s32.totalorder %s30, %s46
      %p48 = scmp.eq.s32.totalorder %s22, 0
      %p49 = por %p47, %p48
      %s51 = sadd.s32 %s50, 1
      %p54 = scmp.eq.s32.totalorder %s16, 1
      %p55 = scmp.ne.s32.totalorder %s50, %s52
      %p56 = scmp.eq.s32.totalorder %s16, 0
      %p57 = por %p55, %p56
      %p58 = scmp.ne.s32.totalorder %s50, %s52
      %p59 = scmp.eq.s32.totalorder %s21, 1
      %p60 = por %p58, %p59
      %p61 = scmp.ne.s32.totalorder %s52, %s53
      %p62 = scmp.eq.s32.totalorder %s21, 0
      %p63 = por %p61, %p62
      %p64 = scmp.ne.s32.totalorder %s52, %s53
      %p65 = scmp.eq.s32.totalorder %s22, 1
      %p66 = por %p64, %p65
      %p68 = scmp.ne.s32.totalorder %s53, %s67
      %p69 = scmp.eq.s32.totalorder %s22, 0
      %p70 = por %p68, %p69
      %s72 = sadd.s32 %s71, 1
      %p75 = scmp.eq.s32.totalorder %s16, 1
      %p76 = scmp.ne.s32.totalorder %s71, %s73
      %p77 = scmp.eq.s32.totalorder %s16, 0
      %p78 = por %p76, %p77
      %p79 = scmp.ne.s32.totalorder %s71, %s73
      %p80 = scmp.eq.s32.totalorder %s21, 1
      %p81 = por %p79, %p80
      %p82 = scmp.ne.s32.totalorder %s73, %s74
      %p83 = scmp.eq.s32.totalorder %s21, 0
      %p84 = por %p82, %p83
      %p85 = scmp.ne.s32.totalorder %s73, %s74
      %p86 = scmp.eq.s32.totalorder %s22, 1
      %p87 = por %p85, %p86
      %p89 = scmp.ne.s32.totalorder %s74, %s88
      %p90 = scmp.eq.s32.totalorder %s22, 0
      %p91 = por %p89, %p90
      %s92 = ssub.s32 %s16, %s23
      %p93 = scmp.eq.s32.totalorder %s92, 0
      %s95 = sadd.s32 %s94, 1
      %s96 = scalar_select %p93, %s94, %s95
      %p99 = pneg %p93
      %p100 = scmp.eq.s32.totalorder %s16, 1
      %p101 = por %p99, %p100
      %p102 = scmp.ne.s32.totalorder %s94, %s97
      %p103 = scmp.eq.s32.totalorder %s16, 0
      %p104 = por %p102, %p103
      %p105 = scmp.ne.s32.totalorder %s94, %s97
      %p106 = scmp.eq.s32.totalorder %s21, 1
      %p107 = por %p105, %p106
      %p108 = scmp.ne.s32.totalorder %s97, %s98
      %p109 = scmp.eq.s32.totalorder %s21, 0
      %p110 = por %p108, %p109
      %p111 = scmp.ne.s32.totalorder %s97, %s98
      %p112 = scmp.eq.s32.totalorder %s22, 1
      %p113 = por %p111, %p112
      %p115 = scmp.ne.s32.totalorder %s98, %s114
      %p116 = scmp.eq.s32.totalorder %s22, 0
      %p117 = por %p115, %p116
      %p118 = scmp.le.s32.totalorder 1, %s16
      %p119 = scmp.lt.s32.totalorder %s16, 3
      %p120 = pnand %p118, %p119
      %p121 = pneg %p120
      // Predicated region
      $region9: #{tpu_custom_call.1} parent=5 // pred_check
        _
      $region10: #{tpu_custom_call.1} parent=5 // pred_check_branch
        %123 = sbr.rel (%p120) target = $region12
      $region11: #{tpu_custom_call.1} parent=5 // pred_region
        %s124 = ssub.s32 %s16, 1
        // Predicated region
        $region13: #{tpu_custom_call.1} parent=11 // pred_check
          %p125 = pneg %p63
        $region14: #{tpu_custom_call.1} parent=11 // pred_check_branch
          %127 = sbr.rel (%p125) target = $region16
        $region15: #{tpu_custom_call.1} parent=11 // pred_region
          %129 = vsyncadd [#allocation6], 0
          %s130 = sshll.u32 %s1, 4
          %s131 = int_to_ptr.hbm [resolvable:$true] %s130
          %s132 = sshll.u32 [#allocation5], 4
          %s133 = int_to_ptr.vmem [resolvable:$true] %s132
          %138 = dma.hbm_to_vmem [thread:$0]  %s131, 2048, %s133, [#allocation6], 128, 128, 8
        $region16: #{tpu_custom_call.1} parent=11 // pred_fallthru
          _
        // Predicated region
        $region17: #{tpu_custom_call.1} parent=11 // pred_check
          %p139 = pneg %p84
        $region18: #{tpu_custom_call.1} parent=11 // pred_check_branch
          %141 = sbr.rel (%p139) target = $region20
        $region19: #{tpu_custom_call.1} parent=11 // pred_region
          _
        $region20: #{tpu_custom_call.1} parent=11 // pred_fallthru
          _
      $region12: #{tpu_custom_call.1} parent=5 // pred_fallthru
        _
      %p142 = scmp.lt.s32.totalorder %s16, 2
      // Predicated region
      $region21: #{tpu_custom_call.1} parent=5 // pred_check
        %p143 = pneg %p142
      $region22: #{tpu_custom_call.1} parent=5 // pred_check_branch
        %145 = sbr.rel (%p143) target = $region24
      $region23: #{tpu_custom_call.1} parent=5 // pred_region
        // Predicated region
        $region25: #{tpu_custom_call.1} parent=23 // pred_check
          %p146 = pneg %p36
        $region26: #{tpu_custom_call.1} parent=23 // pred_check_branch
          %148 = sbr.rel (%p146) target = $region28
        $region27: #{tpu_custom_call.1} parent=23 // pred_region
          %s149 = sand.u32 %s26, 1
          %s150 = scalar_lea.sflag [#allocation3], %s149
          %s151 = sand.u32 %s26, 1
          %s152 = smul.addr %s151, 128
          %s153 = scalar_lea.vmem [#allocation2], %s152
          %s154 = smul.u32 16, %s16
          %156 = vsyncadd %s150, 0
          %s157 = smul.addr %s154, 8
          %s158 = scalar_lea.hbm %s0, %s157
          %s159 = sshll.u32 %s158, 4
          %s160 = int_to_ptr.hbm [resolvable:$true] %s159
          %s161 = sshll.u32 %s153, 4
          %s162 = int_to_ptr.vmem [resolvable:$true] %s161
          %167 = dma.hbm_to_vmem [thread:$0]  %s160, 2048, %s162, %s150, 128, 128, 8
        $region28: #{tpu_custom_call.1} parent=23 // pred_fallthru
          _
      $region24: #{tpu_custom_call.1} parent=5 // pred_fallthru
        _
      %p168 = scmp.le.s32.totalorder 1, %s16
      %p169 = scmp.lt.s32.totalorder %s16, 3
      %p170 = pnand %p168, %p169
      %p171 = pneg %p170
      // Predicated region
      $region29: #{tpu_custom_call.1} parent=5 // pred_check
        _
      $region30: #{tpu_custom_call.1} parent=5 // pred_check_branch
        %173 = sbr.rel (%p170) target = $region32
      $region31: #{tpu_custom_call.1} parent=5 // pred_region
        %s174 = ssub.s32 %s16, 1
        %s175 = sand.u32 %s29, 1
        %s176 = scalar_lea.sflag [#allocation3], %s175
        %s177 = sand.u32 %s29, 1
        %s178 = smul.addr %s177, 128
        %s179 = scalar_lea.vmem [#allocation2], %s178
        // Predicated region
        $region33: #{tpu_custom_call.1} parent=31 // pred_check
          %p180 = pneg %p42
        $region34: #{tpu_custom_call.1} parent=31 // pred_check_branch
          %182 = sbr.rel (%p180) target = $region36
        $region35: #{tpu_custom_call.1} parent=31 // pred_region
          %184 = dma.done %s176, 2048
        $region36: #{tpu_custom_call.1} parent=31 // pred_fallthru
          _
        // Predicated region
        $region37: #{tpu_custom_call.1} parent=31 // pred_check
          %p185 = pneg %p63
        $region38: #{tpu_custom_call.1} parent=31 // pred_check_branch
          %187 = sbr.rel (%p185) target = $region40
        $region39: #{tpu_custom_call.1} parent=31 // pred_region
          %189 = dma.done [#allocation6], 2048
        $region40: #{tpu_custom_call.1} parent=31 // pred_fallthru
          _
        %s190 = sand.u32 %s29, 1
        %s191 = scalar_lea.sflag [#allocation3], %s190
        %s192 = sand.u32 %s29, 1
        %s193 = smul.addr %s192, 128
        %s194 = scalar_lea.vmem [#allocation2], %s193
        %p195 = pneg %p42
        %p196 = pneg %p39
        %p197 = pneg %p63
        %p198 = pneg %p60
        %p199 = pneg %p84
        %p200 = pneg %p81
        %p201 = pneg %p110
        %p202 = pneg %p107
        %s203 = sand.u32 %s97, 1
        %s204 = scalar_lea.sflag [#allocation4], %s203
        %s205 = sand.u32 %s97, 1
        %s206 = smul.addr %s205, 128
        %s207 = scalar_lea.vmem [#allocation7], %s206
        %s208 = smul.u32 16, %s21
        %s209 = smul.u32 16, %s21
        %v210 = vld [vmem:[%s179] sm:$0xff]
        %v211 = vld [vmem:[%s179 + $0x8] sm:$0xff]
        %v212 = vld [vmem:[%s179 + $0x10] sm:$0xff]
        %v213 = vld [vmem:[%s179 + $0x18] sm:$0xff]
        %v214 = vld [vmem:[%s179 + $0x20] sm:$0xff]
        %v215 = vld [vmem:[%s179 + $0x28] sm:$0xff]
        %v216 = vld [vmem:[%s179 + $0x30] sm:$0xff]
        %v217 = vld [vmem:[%s179 + $0x38] sm:$0xff]
        %v218 = vld [vmem:[%s179 + $0x40] sm:$0xff]
        %v219 = vld [vmem:[%s179 + $0x48] sm:$0xff]
        %v220 = vld [vmem:[%s179 + $0x50] sm:$0xff]
        %v221 = vld [vmem:[%s179 + $0x58] sm:$0xff]
        %v222 = vld [vmem:[%s179 + $0x60] sm:$0xff]
        %v223 = vld [vmem:[%s179 + $0x68] sm:$0xff]
        %v224 = vld [vmem:[%s179 + $0x70] sm:$0xff]
        %v225 = vld [vmem:[%s179 + $0x78] sm:$0xff]
        %v226 = vld [vmem:[#allocation5] sm:$0xff]
        %v227 = vld [vmem:[#allocation5 + $0x8] sm:$0xff]
        %v228 = vld [vmem:[#allocation5 + $0x10] sm:$0xff]
        %v229 = vld [vmem:[#allocation5 + $0x18] sm:$0xff]
        %v230 = vld [vmem:[#allocation5 + $0x20] sm:$0xff]
        %v231 = vld [vmem:[#allocation5 + $0x28] sm:$0xff]
        %v232 = vld [vmem:[#allocation5 + $0x30] sm:$0xff]
        %v233 = vld [vmem:[#allocation5 + $0x38] sm:$0xff]
        %v234 = vld [vmem:[#allocation5 + $0x40] sm:$0xff]
        %v235 = vld [vmem:[#allocation5 + $0x48] sm:$0xff]
        %v236 = vld [vmem:[#allocation5 + $0x50] sm:$0xff]
        %v237 = vld [vmem:[#allocation5 + $0x58] sm:$0xff]
        %v238 = vld [vmem:[#allocation5 + $0x60] sm:$0xff]
        %v239 = vld [vmem:[#allocation5 + $0x68] sm:$0xff]
        %v240 = vld [vmem:[#allocation5 + $0x70] sm:$0xff]
        %v241 = vld [vmem:[#allocation5 + $0x78] sm:$0xff]
        %v242 = vld [vmem:[%s2] sm:$0x1]
        %v244 = vperm.slane %v242, 0
        %246 = vmatpush.msra.mxu0 %v241
        %247 = vmatpush.msra.mxu0 %v240
        %248 = vmatpush.msra.mxu0 %v239
        %249 = vmatpush.msra.mxu0 %v238
        %250 = vmatpush.msra.mxu0 %v237
        %251 = vmatpush.msra.mxu0 %v236
        %252 = vmatpush.msra.mxu0 %v235
        %253 = vmatpush.msra.mxu0 %v234
        %254 = vmatpush.msra.mxu0 %v233
        %255 = vmatpush.msra.mxu0 %v232
        %256 = vmatpush.msra.mxu0 %v231
        %257 = vmatpush.msra.mxu0 %v230
        %258 = vmatpush.msra.mxu0 %v229
        %259 = vmatpush.msra.mxu0 %v228
        %260 = vmatpush.msra.mxu0 %v227
        %261 = vmatpush.msra.mxu0 %v226
        %262 = vmatmul.f32.gmra.mxu0 %v210
        %v263 = vpop.f32.mrf.mxu0
        %v264 = vadd.f32 %v244, %v263
        %265 = vmatmul.f32.gmra.mxu0 %v211
        %v266 = vpop.f32.mrf.mxu0
        %v267 = vadd.f32 %v244, %v266
        %268 = vmatmul.f32.gmra.mxu0 %v212
        %v269 = vpop.f32.mrf.mxu0
        %v270 = vadd.f32 %v244, %v269
        %271 = vmatmul.f32.gmra.mxu0 %v213
        %v272 = vpop.f32.mrf.mxu0
        %v273 = vadd.f32 %v244, %v272
        %274 = vmatmul.f32.gmra.mxu0 %v214
        %v275 = vpop.f32.mrf.mxu0
        %v276 = vadd.f32 %v244, %v275
        %277 = vmatmul.f32.gmra.mxu0 %v215
        %v278 = vpop.f32.mrf.mxu0
        %v279 = vadd.f32 %v244, %v278
        %280 = vmatmul.f32.gmra.mxu0 %v216
        %v281 = vpop.f32.mrf.mxu0
        %v282 = vadd.f32 %v244, %v281
        %283 = vmatmul.f32.gmra.mxu0 %v217
        %v284 = vpop.f32.mrf.mxu0
        %v285 = vadd.f32 %v244, %v284
        %286 = vmatmul.f32.gmra.mxu0 %v218
        %v287 = vpop.f32.mrf.mxu0
        %v288 = vadd.f32 %v244, %v287
        %289 = vmatmul.f32.gmra.mxu0 %v219
        %v290 = vpop.f32.mrf.mxu0
        %v291 = vadd.f32 %v244, %v290
        %292 = vmatmul.f32.gmra.mxu0 %v220
        %v293 = vpop.f32.mrf.mxu0
        %v294 = vadd.f32 %v244, %v293
        %295 = vmatmul.f32.gmra.mxu0 %v221
        %v296 = vpop.f32.mrf.mxu0
        %v297 = vadd.f32 %v244, %v296
        %298 = vmatmul.f32.gmra.mxu0 %v222
        %v299 = vpop.f32.mrf.mxu0
        %v300 = vadd.f32 %v244, %v299
        %301 = vmatmul.f32.gmra.mxu0 %v223
        %v302 = vpop.f32.mrf.mxu0
        %v303 = vadd.f32 %v244, %v302
        %304 = vmatmul.f32.gmra.mxu0 %v224
        %v305 = vpop.f32.mrf.mxu0
        %v306 = vadd.f32 %v244, %v305
        %307 = vmatmul.f32.gmra.mxu0 %v225
        %v308 = vpop.f32.mrf.mxu0
        %v309 = vadd.f32 %v244, %v308
        %310 = vdwg.mxu0
        %v311 = vmax.f32 %v264, 0.0
        %v312 = vmax.f32 %v267, 0.0
        %v313 = vmax.f32 %v270, 0.0
        %v314 = vmax.f32 %v273, 0.0
        %v315 = vmax.f32 %v276, 0.0
        %v316 = vmax.f32 %v279, 0.0
        %v317 = vmax.f32 %v282, 0.0
        %v318 = vmax.f32 %v285, 0.0
        %v319 = vmax.f32 %v288, 0.0
        %v320 = vmax.f32 %v291, 0.0
        %v321 = vmax.f32 %v294, 0.0
        %v322 = vmax.f32 %v297, 0.0
        %v323 = vmax.f32 %v300, 0.0
        %v324 = vmax.f32 %v303, 0.0
        %v325 = vmax.f32 %v306, 0.0
        %v326 = vmax.f32 %v309, 0.0
        %327 = vst [vmem:[%s207] sm:$0xff] %v311
        %328 = vst [vmem:[%s207 + $0x8] sm:$0xff] %v312
        %329 = vst [vmem:[%s207 + $0x10] sm:$0xff] %v313
        %330 = vst [vmem:[%s207 + $0x18] sm:$0xff] %v314
        %331 = vst [vmem:[%s207 + $0x20] sm:$0xff] %v315
        %332 = vst [vmem:[%s207 + $0x28] sm:$0xff] %v316
        %333 = vst [vmem:[%s207 + $0x30] sm:$0xff] %v317
        %334 = vst [vmem:[%s207 + $0x38] sm:$0xff] %v318
        %335 = vst [vmem:[%s207 + $0x40] sm:$0xff] %v319
        %336 = vst [vmem:[%s207 + $0x48] sm:$0xff] %v320
        %337 = vst [vmem:[%s207 + $0x50] sm:$0xff] %v321
        %338 = vst [vmem:[%s207 + $0x58] sm:$0xff] %v322
        %339 = vst [vmem:[%s207 + $0x60] sm:$0xff] %v323
        %340 = vst [vmem:[%s207 + $0x68] sm:$0xff] %v324
        %341 = vst [vmem:[%s207 + $0x70] sm:$0xff] %v325
        %342 = vst [vmem:[%s207 + $0x78] sm:$0xff] %v326
        %s343 = sand.u32 %s97, 1
        %s344 = scalar_lea.sflag [#allocation4], %s343
        %s345 = sand.u32 %s97, 1
        %s346 = smul.addr %s345, 128
        %s347 = scalar_lea.vmem [#allocation7], %s346
        // Predicated region
        $region41: #{tpu_custom_call.1} parent=31 // pred_check
          %p348 = pneg %p107
        $region42: #{tpu_custom_call.1} parent=31 // pred_check_branch
          %350 = sbr.rel (%p348) target = $region44
        $region43: #{tpu_custom_call.1} parent=31 // pred_region
          %s351 = smul.u32 16, %s21
          %353 = vsyncadd %s344, 0
          %s354 = smul.addr %s351, 8
          %s355 = scalar_lea.hbm %s3, %s354
          %s356 = sshll.u32 %s347, 4
          %s357 = int_to_ptr.vmem [resolvable:$true] %s356
          %s358 = sshll.u32 %s355, 4
          %s359 = int_to_ptr.hbm [resolvable:$true] %s358
          %364 = dma.vmem_to_hbm [thread:$0]  %s357, 2048, %s359, %s344, 128, 128, 8
        $region44: #{tpu_custom_call.1} parent=31 // pred_fallthru
          _
      $region32: #{tpu_custom_call.1} parent=5 // pred_fallthru
        _
      %p365 = scmp.le.s32.totalorder 2, %s16
      // Predicated region
      $region45: #{tpu_custom_call.1} parent=5 // pred_check
        %p366 = pneg %p365
      $region46: #{tpu_custom_call.1} parent=5 // pred_check_branch
        %368 = sbr.rel (%p366) target = $region48
      $region47: #{tpu_custom_call.1} parent=5 // pred_region
        %s369 = ssub.s32 %s16, 2
        // Predicated region
        $region49: #{tpu_custom_call.1} parent=47 // pred_check
          %p370 = pneg %p113
        $region50: #{tpu_custom_call.1} parent=47 // pred_check_branch
          %372 = sbr.rel (%p370) target = $region52
        $region51: #{tpu_custom_call.1} parent=47 // pred_region
          %s373 = sand.u32 %s98, 1
          %s374 = scalar_lea.sflag [#allocation4], %s373
          %s375 = sand.u32 %s98, 1
          %s376 = smul.addr %s375, 128
          %s377 = scalar_lea.vmem [#allocation7], %s376
          %379 = dma.done %s374, 2048
        $region52: #{tpu_custom_call.1} parent=47 // pred_fallthru
          _
      $region48: #{tpu_custom_call.1} parent=5 // pred_fallthru
        _
    $region6: #{tpu_custom_call.1} parent=1 // loop_footer
      %s20 = sadd.s32 1, %s16
    $region7: #{tpu_custom_call.1} parent=1 // loop_footer_branch
      %15 = sbr.rel target = $region3
    $region8: #{tpu_custom_call.1} parent=1 // loop_exit
      _
    %380 = vsyncpa [#allocation3], 1
    %s381 = scalar_lea.sflag [#allocation3], 1
    %382 = vsyncpa %s381, 1
    %383 = vsyncpa [#allocation6], 1
    %384 = vsyncpa [#allocation4], 1
    %s385 = scalar_lea.sflag [#allocation4], 1
    %386 = vsyncpa %s385, 1

</llo_original>
